<compile_context>
chip_gen: v6e
topology: v6e:2x2x1
jax: 0.10.0
libtpu: 0.0.40
codegen_flags: <defaults>
</compile_context>

<pallas_src>
import jax
import jax.numpy as jnp
from jax.experimental import pallas as pl
from jax.experimental.pallas import tpu as pltpu

_INV_SQRT2 = 0.7071067811865475
_WIDTH_CANDIDATES = (2048, 1024, 512, 256, 128)


def _gelu_kernel(x_ref, y_ref):
    # Upcast to f32 in-register (free VALU slack under the DMA; required on v5e
    # anyway, and matches the f32 reference numerics for bf16/f16 inputs).
    x = x_ref[...].astype(jnp.float32)
    half_x = x * 0.5
    # half_x * erf(x/sqrt(2)) + half_x == 0.5*x*(1 + erf(x/sqrt(2)))
    y = half_x * jax.lax.erf(x * _INV_SQRT2) + half_x
    y_ref[...] = y.astype(y_ref.dtype)


def _gelu_lane_dense(x2d: jax.Array, target_block_bytes: int) -> jax.Array:
    """Run the GELU kernel on a lane-dense (rows, width) slab.

    width is a multiple of 128; rows may be anything.
    """
    rows, width = x2d.shape
    dtype = x2d.dtype
    itemsize = jnp.dtype(dtype).itemsize

    # Native sublane multiple for this dtype (sub-32-bit dtypes pack sublanes).
    sublane = max(8, 32 // itemsize)

    # Row tile sized for ~target_block_bytes per block.
    row_tile = max(1, target_block_bytes // (width * itemsize))

    if rows >= 2 * sublane:
        # Cap the tile so the grid has at least 2 steps whenever rows permit two
        # full sublane-aligned tiles -> both v7x TensorCores participate.
        max_tile = (pl.cdiv(rows, 2) // sublane) * sublane
        row_tile = min(row_tile, max_tile)
        row_tile = max(sublane, (row_tile // sublane) * sublane)
    else:
        # Single block covering the whole (small) second-to-last dim; full-extent
        # blocks are exempt from the (8, 128) divisibility rule.
        row_tile = rows

    grid = (pl.cdiv(rows, row_tile),)

    return pl.pallas_call(
        _gelu_kernel,
        out_shape=jax.ShapeDtypeStruct((rows, width), dtype),
        grid=grid,
        in_specs=[pl.BlockSpec((row_tile, width), lambda i: (i, 0))],
        out_specs=pl.BlockSpec((row_tile, width), lambda i: (i, 0)),
        compiler_params=pltpu.CompilerParams(
            dimension_semantics=("parallel",),
            vmem_limit_bytes=32 << 20,
        ),
    )(x2d)


def _gelu_xla(x: jax.Array) -> jax.Array:
    xf = x.astype(jnp.float32)
    return (0.5 * xf * (1.0 + jax.lax.erf(xf * _INV_SQRT2))).astype(x.dtype)


def gelu_pallas(x: jax.Array, *, target_block_bytes: int = 4 << 20) -> jax.Array:
    orig_shape = x.shape
    n = x.size
    if n == 0:
        return x

    x_flat = jnp.ravel(x)

    # Pick the widest lane-dense width (multiple of 128) that divides n so no
    # padding/copy is needed (always possible for typical NCHW sizes).
    width = None
    for cand in _WIDTH_CANDIDATES:
        if n % cand == 0:
            width = cand
            break

    if width is not None:
        y_flat = _gelu_lane_dense(
            x_flat.reshape(n // width, width), target_block_bytes
        ).reshape(n)
    else:
        # Ragged case: kernel on the multiple-of-128 prefix, plain XLA on the
        # <=127-element tail. No whole-array padding copy.
        n_main = (n // 128) * 128
        y_tail = _gelu_xla(x_flat[n_main:])
        if n_main:
            w = next(c for c in _WIDTH_CANDIDATES if n_main % c == 0)
            y_main = _gelu_lane_dense(
                x_flat[:n_main].reshape(n_main // w, w), target_block_bytes
            ).reshape(n_main)
            y_flat = jnp.concatenate([y_main, y_tail])
        else:
            y_flat = y_tail

    return y_flat.reshape(orig_shape)


def gelu_ref(x: jax.Array) -> jax.Array:
    xf = x.astype(jnp.float32)
    return (0.5 * xf * (1.0 + jax.lax.erf(xf * _INV_SQRT2))).astype(x.dtype)


if __name__ == "__main__":
    key = jax.random.PRNGKey(0)

    # 1) NCHW-style f32 input, small shape (single-block path).
    x = jax.random.normal(key, (2, 4, 16, 16), dtype=jnp.float32)
    y = jax.block_until_ready(gelu_pallas(x))
    y_ref = gelu_ref(x)
    assert y.shape == x.shape and y.dtype == x.dtype
    assert jnp.allclose(y, y_ref, atol=1e-6, rtol=1e-6), "f32 mismatch vs reference GELU"

    # 2) Larger f32 input exercising the >=2-step (dual-TensorCore) grid path.
    k1, k2, k3 = jax.random.split(key, 3)
    x_big = jax.random.normal(k1, (8, 64, 32, 32), dtype=jnp.float32)
    y_big = jax.block_until_ready(gelu_pallas(x_big))
    assert jnp.allclose(y_big, gelu_ref(x_big), atol=1e-6, rtol=1e-6), "f32 (multi-step) mismatch"

    # 3) bf16 input: HBM I/O in bf16, compute upcast to f32 inside the kernel.
    x_bf16 = jax.random.normal(k2, (2, 4, 16, 16), dtype=jnp.bfloat16)
    y_bf16 = jax.block_until_ready(gelu_pallas(x_bf16))
    assert y_bf16.dtype == jnp.bfloat16
    assert jnp.allclose(
        y_bf16.astype(jnp.float32), gelu_ref(x_bf16).astype(jnp.float32),
        atol=2e-2, rtol=2e-2,
    ), "bf16 mismatch vs reference GELU"

    # 4) Ragged length (n % 128 != 0): prefix kernel + XLA tail.
    x_rag = jax.random.normal(k3, (1, 130), dtype=jnp.float32)
    y_rag = jax.block_until_ready(gelu_pallas(x_rag))
    assert jnp.allclose(y_rag, gelu_ref(x_rag), atol=1e-6, rtol=1e-6), "ragged mismatch"

    print("KERNEL_OK")
</pallas_src>

<mosaic_0001>
module attributes {stable_mosaic.version = 11 : i64} {
  func.func @_gelu_kernel(%arg0: i32, %arg1: memref<1x2048xf32, #tpu.memory_space<vmem>>, %arg2: memref<1x2048xf32, #tpu.memory_space<vmem>>) attributes {dimension_semantics = [#tpu.dimension_semantics<parallel>], iteration_bounds = array<i64: 1>, scalar_prefetch = 0 : i64, scratch_operands = 0 : i64, tpu.core_type = #tpu.core_type<tc>, window_params = [{transform_indices = @transform_0, window_bounds = array<i64: 1, 2048>}, {transform_indices = @transform_1, window_bounds = array<i64: 1, 2048>}]} {
    %c0 = arith.constant 0 : index
    %c0_0 = arith.constant 0 : index
    %0 = vector.load %arg1[%c0, %c0_0] : memref<1x2048xf32, #tpu.memory_space<vmem>>, vector<1x2048xf32>
    %cst = arith.constant 5.000000e-01 : f32
    %1 = vector.broadcast %cst : f32 to vector<1x2048xf32>
    %2 = arith.mulf %0, %1 : vector<1x2048xf32>
    %cst_1 = arith.constant 0.707106769 : f32
    %3 = vector.broadcast %cst_1 : f32 to vector<1x2048xf32>
    %4 = arith.mulf %0, %3 : vector<1x2048xf32>
    %5 = math.erf %4 : vector<1x2048xf32>
    %6 = arith.mulf %2, %5 : vector<1x2048xf32>
    %7 = arith.addf %6, %2 : vector<1x2048xf32>
    %c0_2 = arith.constant 0 : index
    %c0_3 = arith.constant 0 : index
    %8 = vector.load %arg2[%c0_2, %c0_3] : memref<1x2048xf32, #tpu.memory_space<vmem>>, vector<1x2048xf32>
    tpu.vector_store %arg2[%c0_2, %c0_3], %7 {strides = array<i32>} : memref<1x2048xf32, #tpu.memory_space<vmem>>, vector<1x2048xf32>,
    return
  }
  func.func @transform_0(%arg0: i32) -> (i32, i32) {
    %c0_i32 = arith.constant 0 : i32
    %c0_i32_0 = arith.constant 0 : i32
    return %arg0, %c0_i32 : i32, i32
  }
  func.func @transform_1(%arg0: i32) -> (i32, i32) {
    %c0_i32 = arith.constant 0 : i32
    %c0_i32_0 = arith.constant 0 : i32
    return %arg0, %c0_i32 : i32, i32
  }
}

</mosaic_0001>

<llo_original>
// kernel: tpu_custom_call.1
$region0: #{tpu_custom_call.1}
  #allocation0 [shape = 'u32[]', space=smem, size = 0x4, offset = 0x4, fixed_abs, tag = 'smem constant byte address 0x4 - core index']
  #allocation1 [shape = 'u32[144,128]{1,0:T(1,128)}', space=vmem, size = 0x12000, scoped, tag = 'internal scratch']
  %s0 = inlined_call_operand.hbm [shape: f32[1,2048], index: 0, kind: input, shape index: {}]
  %s1 = inlined_call_operand.hbm [shape: f32[1,2048], index: 1, kind: output, shape index: {}]
  %s2 = sld [smem:[#allocation0]]
  $region18: #{tpu_custom_call.1} parent=0
    _
  %s4 = ssub.s32 1, %s2
  %s5 = scalar_select 0, %s4, %s2
  $region1: #{tpu_custom_call.1} parent=0
    #allocation2 [shape = 'u8[8192]{0}', space=vmem, size = 0x2000, scoped, tag = 'input window, operand 0, single buffered']
    #allocation3 [shape = 's32[1]{0}', space=sflag, size = 0x4, scoped, tag = 'scoped memory for tpu_custom_call.1']
    #allocation4 [shape = 's32[1]{0}', space=sflag, size = 0x4, scoped, tag = 'scoped memory for tpu_custom_call.1']
    #allocation5 [shape = 'u8[8192]{0}', space=vmem, size = 0x2000, scoped, tag = 'output window, operand 0, single buffered']
    %6 = vsyncpa [#allocation3], 0
    %7 = vsyncpa [#allocation4], 0
    // Predicated region
    $region2: #{tpu_custom_call.1} parent=1 // pred_check
      _
    $region3: #{tpu_custom_call.1} parent=1 // pred_check_branch
      %9 = sbr.rel (0) target = $region5
    $region4: #{tpu_custom_call.1} parent=1 // pred_region
      %s11 = ssub.s32 256, 256
      %12 = vsyncadd [#allocation3], %s11
      %s14 = sshll.u32 [#allocation2], 4
      %s15 = int_to_ptr.vmem [resolvable:$true] %s14
      %17 = dma.hbm_to_vmem [thread:$0]  %s0, 256, %s15, [#allocation3]
    $region5: #{tpu_custom_call.1} parent=1 // pred_fallthru
      _
    // Predicated region
    $region6: #{tpu_custom_call.1} parent=1 // pred_check
      _
    $region7: #{tpu_custom_call.1} parent=1 // pred_check_branch
      %19 = sbr.rel (0) target = $region9
    $region8: #{tpu_custom_call.1} parent=1 // pred_region
      %20 = dma.done [#allocation3], 256
    $region9: #{tpu_custom_call.1} parent=1 // pred_fallthru
      _
    %v21 = vld [vmem:[#allocation2] sm:$0xff]
    %v22 = vld [vmem:[#allocation2 + $0x8] sm:$0xff]
    %v23 = vmul.f32 %v21, 0.5
    %v24 = vmul.f32 %v22, 0.5
    %v25 = vmul.f32 %v21, 0.70710677
    %v26 = vmul.f32 %v22, 0.70710677
    %v27 = verf.f32.pop %v25
    %v28 = verf.f32.pop %v26
    %v29 = vmul.f32 %v23, %v27
    %v30 = vmul.f32 %v24, %v28
    %v31 = vadd.f32 %v29, %v23
    %v32 = vadd.f32 %v30, %v24
    %33 = vst [vmem:[#allocation5] sm:$0xff] %v31
    %34 = vst [vmem:[#allocation5 + $0x8] sm:$0xff] %v32
    // Predicated region
    $region10: #{tpu_custom_call.1} parent=1 // pred_check
      _
    $region11: #{tpu_custom_call.1} parent=1 // pred_check_branch
      %36 = sbr.rel (0) target = $region13
    $region12: #{tpu_custom_call.1} parent=1 // pred_region
      %s38 = ssub.s32 256, 256
      %39 = vsyncadd [#allocation4], %s38
      %s41 = sshll.u32 [#allocation5], 4
      %s42 = int_to_ptr.vmem [resolvable:$true] %s41
      %44 = dma.vmem_to_hbm [thread:$0]  %s42, 256, %s1, [#allocation4]
    $region13: #{tpu_custom_call.1} parent=1 // pred_fallthru
      _
    // Predicated region
    $region14: #{tpu_custom_call.1} parent=1 // pred_check
      _
    $region15: #{tpu_custom_call.1} parent=1 // pred_check_branch
      %46 = sbr.rel (0) target = $region17
    $region16: #{tpu_custom_call.1} parent=1 // pred_region
      %47 = dma.done [#allocation4], 256
    $region17: #{tpu_custom_call.1} parent=1 // pred_fallthru
      _
    %48 = vsyncpa [#allocation3], 1
    %49 = vsyncpa [#allocation4], 1

</llo_original>
